<compile_context>
chip_gen: v5e
topology: v5e:2x2
jax: 0.10.0
libtpu: 0.0.40
codegen_flags: <defaults>
</compile_context>

<pallas_src>
import functools

import jax
import jax.numpy as jnp
from jax.experimental import pallas as pl
from jax.experimental.pallas import tpu as pltpu

LANE = 128
SUBLANE = 8


def _round_up(n, m):
    return ((n + m - 1) // m) * m


def _mlp_kernel(x_ref,
                w0_ref, b0_ref,
                w1_ref, b1_ref,
                w2_ref, b2_ref,
                w3_ref, b3_ref,
                w4_ref, b4_ref,
                o_ref):
    """One batch tile: 4x (matmul + bias + ReLU) then matmul + bias, all in VMEM."""

    def layer(h, w_ref, b_ref, relu):
        # Cast activations at the MXU boundary only (no-op for f32 weights);
        # accumulate in f32 and do bias + ReLU in f32 on the VPU.
        acc = jnp.dot(h.astype(w_ref.dtype), w_ref[...],
                      preferred_element_type=jnp.float32) + b_ref[...]
        return jnp.maximum(acc, 0.0) if relu else acc

    h = x_ref[...]
    h = layer(h, w0_ref, b0_ref, True)
    h = layer(h, w1_ref, b1_ref, True)
    h = layer(h, w2_ref, b2_ref, True)
    h = layer(h, w3_ref, b3_ref, True)
    o_ref[...] = layer(h, w4_ref, b4_ref, False).astype(o_ref.dtype)


@functools.partial(jax.jit, static_argnames=("batch_tile", "mxu_dtype"))
def network_anchor_forward(x, params, *, batch_tile=512, mxu_dtype=jnp.float32):
    """x: (B, input_size) f32; params: list of (W, b) with W=(in, out), b=(1, out)."""
    B, in_size = x.shape
    out_size = params[-1][0].shape[1]

    # --- Pad feature dims to 128 lanes (zero padding keeps the math exact). ---
    flat_padded = []
    for w, b in params:
        fi, fo = w.shape
        fi_p, fo_p = _round_up(fi, LANE), _round_up(fo, LANE)
        w_p = jnp.zeros((fi_p, fo_p), jnp.float32).at[:fi, :fo].set(w)
        b_p = jnp.zeros((1, fo_p), jnp.float32).at[:, :fo].set(b)
        flat_padded.append(w_p.astype(mxu_dtype))  # weights may be bf16 (half DMA bytes)
        flat_padded.append(b_p)                    # bias stays f32
    in_pad = flat_padded[0].shape[0]
    out_pad = flat_padded[-1].shape[1]

    # --- Tile batch: TB multiple of 8 sublanes; pad B up to a multiple of TB. ---
    tb = min(batch_tile, _round_up(B, SUBLANE))
    tb = _round_up(tb, SUBLANE)
    b_pad = _round_up(B, tb)
    x_p = jnp.zeros((b_pad, in_pad), jnp.float32).at[:B, :in_size].set(x)

    grid = (b_pad // tb,)

    in_specs = [pl.BlockSpec((tb, in_pad), lambda i: (i, 0))]
    # Constant index_map -> each weight/bias is fetched once and stays VMEM-resident.
    for p in flat_padded:
        in_specs.append(pl.BlockSpec(p.shape, lambda i: (0, 0)))
    out_specs = pl.BlockSpec((tb, out_pad), lambda i: (i, 0))

    param_bytes = sum(int(p.size) * p.dtype.itemsize for p in flat_padded)
    flops = 2 * b_pad * sum(int(p.size) for p in flat_padded[::2])
    cost = pl.CostEstimate(
        flops=flops,
        transcendentals=0,
        bytes_accessed=int(x_p.size) * 4 + param_bytes + b_pad * out_pad * 4,
    )

    out_p = pl.pallas_call(
        _mlp_kernel,
        out_shape=jax.ShapeDtypeStruct((b_pad, out_pad), jnp.float32),
        grid=grid,
        in_specs=in_specs,
        out_specs=out_specs,
        compiler_params=pltpu.CompilerParams(dimension_semantics=("parallel",)),
        cost_estimate=cost,
    )(x_p, *flat_padded)

    return out_p[:B, :out_size]


def init_params(key, input_size, hidden_size, output_size):
    """Deterministic synthetic init (PyTorch-like uniform fan-in scaling)."""
    sizes = [(input_size, hidden_size),
             (hidden_size, hidden_size),
             (hidden_size, hidden_size),
             (hidden_size, hidden_size),
             (hidden_size, output_size)]
    params = []
    for i, (fan_in, fan_out) in enumerate(sizes):
        kw, kb = jax.random.split(jax.random.fold_in(key, i))
        bound = 1.0 / jnp.sqrt(fan_in)
        w = jax.random.uniform(kw, (fan_in, fan_out), jnp.float32, -bound, bound)
        b = jax.random.uniform(kb, (1, fan_out), jnp.float32, -bound, bound)
        params.append((w, b))
    return params


def reference_forward(x, params):
    h = x
    for i, (w, b) in enumerate(params):
        h = h @ w + b
        if i < len(params) - 1:
            h = jnp.maximum(h, 0.0)
    return h


if __name__ == "__main__":
    key = jax.random.PRNGKey(0)
    batch, input_size, hidden_size, output_size = 8, 16, 32, 8

    kx, kp = jax.random.split(key)
    x = jax.random.normal(kx, (batch, input_size), jnp.float32)
    params = init_params(kp, input_size, hidden_size, output_size)

    # f32 path, tiny batch (single grid step).
    out = jax.block_until_ready(network_anchor_forward(x, params))
    ref = reference_forward(x, params)
    assert out.shape == (batch, output_size)
    assert jnp.allclose(out, ref, atol=1e-4, rtol=1e-4), "mismatch vs JAX reference (f32)"

    # bf16-at-the-MXU path (v6e/v7x oriented): must run clean and stay finite.
    out_bf16 = jax.block_until_ready(
        network_anchor_forward(x, params, mxu_dtype=jnp.bfloat16))
    assert out_bf16.shape == (batch, output_size)
    assert bool(jnp.all(jnp.isfinite(out_bf16)))

    # Larger, non-multiple batch exercising the batch grid axis + row padding.
    xb = jax.random.normal(jax.random.fold_in(key, 7), (1030, input_size), jnp.float32)
    out_b = jax.block_until_ready(network_anchor_forward(xb, params, batch_tile=512))
    ref_b = reference_forward(xb, params)
    assert out_b.shape == (1030, output_size)
    assert jnp.allclose(out_b, ref_b, atol=1e-4, rtol=1e-4), "mismatch vs JAX reference (batched)"

    # TODO(synk): PCA_svd staticmethod (torch.svd) is not part of forward(); not implemented in-kernel.
    print("KERNEL_OK")
</pallas_src>

<mosaic_0001>
module attributes {stable_mosaic.version = 11 : i64} {
  func.func @_mlp_kernel(%arg0: i32, %arg1: memref<8x128xf32, #tpu.memory_space<vmem>>, %arg2: memref<128x128xf32, #tpu.memory_space<vmem>>, %arg3: memref<1x128xf32, #tpu.memory_space<vmem>>, %arg4: memref<128x128xf32, #tpu.memory_space<vmem>>, %arg5: memref<1x128xf32, #tpu.memory_space<vmem>>, %arg6: memref<128x128xf32, #tpu.memory_space<vmem>>, %arg7: memref<1x128xf32, #tpu.memory_space<vmem>>, %arg8: memref<128x128xf32, #tpu.memory_space<vmem>>, %arg9: memref<1x128xf32, #tpu.memory_space<vmem>>, %arg10: memref<128x128xf32, #tpu.memory_space<vmem>>, %arg11: memref<1x128xf32, #tpu.memory_space<vmem>>, %arg12: memref<8x128xf32, #tpu.memory_space<vmem>>) attributes {dimension_semantics = [#tpu.dimension_semantics<parallel>], iteration_bounds = array<i64: 1>, scalar_prefetch = 0 : i64, scratch_operands = 0 : i64, tpu.core_type = #tpu.core_type<tc>, window_params = [{transform_indices = @transform_0, window_bounds = array<i64: 8, 128>}, {pipeline_mode = #tpu.pipeline_mode<synchronous>, transform_indices = @transform_1, window_bounds = array<i64: 128, 128>}, {pipeline_mode = #tpu.pipeline_mode<synchronous>, transform_indices = @transform_2, window_bounds = array<i64: 1, 128>}, {pipeline_mode = #tpu.pipeline_mode<synchronous>, transform_indices = @transform_3, window_bounds = array<i64: 128, 128>}, {pipeline_mode = #tpu.pipeline_mode<synchronous>, transform_indices = @transform_4, window_bounds = array<i64: 1, 128>}, {pipeline_mode = #tpu.pipeline_mode<synchronous>, transform_indices = @transform_5, window_bounds = array<i64: 128, 128>}, {pipeline_mode = #tpu.pipeline_mode<synchronous>, transform_indices = @transform_6, window_bounds = array<i64: 1, 128>}, {pipeline_mode = #tpu.pipeline_mode<synchronous>, transform_indices = @transform_7, window_bounds = array<i64: 128, 128>}, {pipeline_mode = #tpu.pipeline_mode<synchronous>, transform_indices = @transform_8, window_bounds = array<i64: 1, 128>}, {pipeline_mode = #tpu.pipeline_mode<synchronous>, transform_indices = @transform_9, window_bounds = array<i64: 128, 128>}, {pipeline_mode = #tpu.pipeline_mode<synchronous>, transform_indices = @transform_10, window_bounds = array<i64: 1, 128>}, {transform_indices = @transform_11, window_bounds = array<i64: 8, 128>}]} {
    %c0 = arith.constant 0 : index
    %c0_0 = arith.constant 0 : index
    %0 = vector.load %arg1[%c0, %c0_0] : memref<8x128xf32, #tpu.memory_space<vmem>>, vector<8x128xf32>
    %c0_1 = arith.constant 0 : index
    %c0_2 = arith.constant 0 : index
    %1 = vector.load %arg2[%c0_1, %c0_2] : memref<128x128xf32, #tpu.memory_space<vmem>>, vector<128x128xf32>
    %cst = arith.constant dense<0.000000e+00> : vector<8x128xf32>
    %2 = tpu.matmul %0, %1, %cst {dimension_numbers = #tpu.dot_dimension_numbers<[1], [0], [0], [1], [0, 0, 1, 1], [], []>} : vector<8x128xf32>, vector<128x128xf32>, vector<8x128xf32> -> vector<8x128xf32>
    %c0_3 = arith.constant 0 : index
    %c0_4 = arith.constant 0 : index
    %3 = vector.load %arg3[%c0_3, %c0_4] : memref<1x128xf32, #tpu.memory_space<vmem>>, vector<1x128xf32>
    %4 = vector.broadcast %3 : vector<1x128xf32> to vector<8x128xf32>
    %5 = arith.addf %2, %4 : vector<8x128xf32>
    %cst_5 = arith.constant 0.000000e+00 : f32
    %6 = vector.broadcast %cst_5 : f32 to vector<8x128xf32>
    %7 = arith.maximumf %5, %6 : vector<8x128xf32>
    %c0_6 = arith.constant 0 : index
    %c0_7 = arith.constant 0 : index
    %8 = vector.load %arg4[%c0_6, %c0_7] : memref<128x128xf32, #tpu.memory_space<vmem>>, vector<128x128xf32>
    %cst_8 = arith.constant dense<0.000000e+00> : vector<8x128xf32>
    %9 = tpu.matmul %7, %8, %cst_8 {dimension_numbers = #tpu.dot_dimension_numbers<[1], [0], [0], [1], [0, 0, 1, 1], [], []>} : vector<8x128xf32>, vector<128x128xf32>, vector<8x128xf32> -> vector<8x128xf32>
    %c0_9 = arith.constant 0 : index
    %c0_10 = arith.constant 0 : index
    %10 = vector.load %arg5[%c0_9, %c0_10] : memref<1x128xf32, #tpu.memory_space<vmem>>, vector<1x128xf32>
    %11 = vector.broadcast %10 : vector<1x128xf32> to vector<8x128xf32>
    %12 = arith.addf %9, %11 : vector<8x128xf32>
    %cst_11 = arith.constant 0.000000e+00 : f32
    %13 = vector.broadcast %cst_11 : f32 to vector<8x128xf32>
    %14 = arith.maximumf %12, %13 : vector<8x128xf32>
    %c0_12 = arith.constant 0 : index
    %c0_13 = arith.constant 0 : index
    %15 = vector.load %arg6[%c0_12, %c0_13] : memref<128x128xf32, #tpu.memory_space<vmem>>, vector<128x128xf32>
    %cst_14 = arith.constant dense<0.000000e+00> : vector<8x128xf32>
    %16 = tpu.matmul %14, %15, %cst_14 {dimension_numbers = #tpu.dot_dimension_numbers<[1], [0], [0], [1], [0, 0, 1, 1], [], []>} : vector<8x128xf32>, vector<128x128xf32>, vector<8x128xf32> -> vector<8x128xf32>
    %c0_15 = arith.constant 0 : index
    %c0_16 = arith.constant 0 : index
    %17 = vector.load %arg7[%c0_15, %c0_16] : memref<1x128xf32, #tpu.memory_space<vmem>>, vector<1x128xf32>
    %18 = vector.broadcast %17 : vector<1x128xf32> to vector<8x128xf32>
    %19 = arith.addf %16, %18 : vector<8x128xf32>
    %cst_17 = arith.constant 0.000000e+00 : f32
    %20 = vector.broadcast %cst_17 : f32 to vector<8x128xf32>
    %21 = arith.maximumf %19, %20 : vector<8x128xf32>
    %c0_18 = arith.constant 0 : index
    %c0_19 = arith.constant 0 : index
    %22 = vector.load %arg8[%c0_18, %c0_19] : memref<128x128xf32, #tpu.memory_space<vmem>>, vector<128x128xf32>
    %cst_20 = arith.constant dense<0.000000e+00> : vector<8x128xf32>
    %23 = tpu.matmul %21, %22, %cst_20 {dimension_numbers = #tpu.dot_dimension_numbers<[1], [0], [0], [1], [0, 0, 1, 1], [], []>} : vector<8x128xf32>, vector<128x128xf32>, vector<8x128xf32> -> vector<8x128xf32>
    %c0_21 = arith.constant 0 : index
    %c0_22 = arith.constant 0 : index
    %24 = vector.load %arg9[%c0_21, %c0_22] : memref<1x128xf32, #tpu.memory_space<vmem>>, vector<1x128xf32>
    %25 = vector.broadcast %24 : vector<1x128xf32> to vector<8x128xf32>
    %26 = arith.addf %23, %25 : vector<8x128xf32>
    %cst_23 = arith.constant 0.000000e+00 : f32
    %27 = vector.broadcast %cst_23 : f32 to vector<8x128xf32>
    %28 = arith.maximumf %26, %27 : vector<8x128xf32>
    %c0_24 = arith.constant 0 : index
    %c0_25 = arith.constant 0 : index
    %29 = vector.load %arg10[%c0_24, %c0_25] : memref<128x128xf32, #tpu.memory_space<vmem>>, vector<128x128xf32>
    %cst_26 = arith.constant dense<0.000000e+00> : vector<8x128xf32>
    %30 = tpu.matmul %28, %29, %cst_26 {dimension_numbers = #tpu.dot_dimension_numbers<[1], [0], [0], [1], [0, 0, 1, 1], [], []>} : vector<8x128xf32>, vector<128x128xf32>, vector<8x128xf32> -> vector<8x128xf32>
    %c0_27 = arith.constant 0 : index
    %c0_28 = arith.constant 0 : index
    %31 = vector.load %arg11[%c0_27, %c0_28] : memref<1x128xf32, #tpu.memory_space<vmem>>, vector<1x128xf32>
    %32 = vector.broadcast %31 : vector<1x128xf32> to vector<8x128xf32>
    %33 = arith.addf %30, %32 : vector<8x128xf32>
    %c0_29 = arith.constant 0 : index
    %c0_30 = arith.constant 0 : index
    %34 = vector.load %arg12[%c0_29, %c0_30] : memref<8x128xf32, #tpu.memory_space<vmem>>, vector<8x128xf32>
    tpu.vector_store %arg12[%c0_29, %c0_30], %33 {strides = array<i32>} : memref<8x128xf32, #tpu.memory_space<vmem>>, vector<8x128xf32>,
    return
  }
  func.func @transform_0(%arg0: i32) -> (i32, i32) {
    %c0_i32 = arith.constant 0 : i32
    %c0_i32_0 = arith.constant 0 : i32
    return %arg0, %c0_i32 : i32, i32
  }
  func.func @transform_1(%arg0: i32) -> (i32, i32) {
    %c0_i32 = arith.constant 0 : i32
    %c0_i32_0 = arith.constant 0 : i32
    %c0_i32_1 = arith.constant 0 : i32
    return %c0_i32, %c0_i32_0 : i32, i32
  }
  func.func @transform_2(%arg0: i32) -> (i32, i32) {
    %c0_i32 = arith.constant 0 : i32
    %c0_i32_0 = arith.constant 0 : i32
    %c0_i32_1 = arith.constant 0 : i32
    return %c0_i32, %c0_i32_0 : i32, i32
  }
  func.func @transform_3(%arg0: i32) -> (i32, i32) {
    %c0_i32 = arith.constant 0 : i32
    %c0_i32_0 = arith.constant 0 : i32
    %c0_i32_1 = arith.constant 0 : i32
    return %c0_i32, %c0_i32_0 : i32, i32
  }
  func.func @transform_4(%arg0: i32) -> (i32, i32) {
    %c0_i32 = arith.constant 0 : i32
    %c0_i32_0 = arith.constant 0 : i32
    %c0_i32_1 = arith.constant 0 : i32
    return %c0_i32, %c0_i32_0 : i32, i32
  }
  func.func @transform_5(%arg0: i32) -> (i32, i32) {
    %c0_i32 = arith.constant 0 : i32
    %c0_i32_0 = arith.constant 0 : i32
    %c0_i32_1 = arith.constant 0 : i32
    return %c0_i32, %c0_i32_0 : i32, i32
  }
  func.func @transform_6(%arg0: i32) -> (i32, i32) {
    %c0_i32 = arith.constant 0 : i32
    %c0_i32_0 = arith.constant 0 : i32
    %c0_i32_1 = arith.constant 0 : i32
    return %c0_i32, %c0_i32_0 : i32, i32
  }
  func.func @transform_7(%arg0: i32) -> (i32, i32) {
    %c0_i32 = arith.constant 0 : i32
    %c0_i32_0 = arith.constant 0 : i32
    %c0_i32_1 = arith.constant 0 : i32
    return %c0_i32, %c0_i32_0 : i32, i32
  }
  func.func @transform_8(%arg0: i32) -> (i32, i32) {
    %c0_i32 = arith.constant 0 : i32
    %c0_i32_0 = arith.constant 0 : i32
    %c0_i32_1 = arith.constant 0 : i32
    return %c0_i32, %c0_i32_0 : i32, i32
  }
  func.func @transform_9(%arg0: i32) -> (i32, i32) {
    %c0_i32 = arith.constant 0 : i32
    %c0_i32_0 = arith.constant 0 : i32
    %c0_i32_1 = arith.constant 0 : i32
    return %c0_i32, %c0_i32_0 : i32, i32
  }
  func.func @transform_10(%arg0: i32) -> (i32, i32) {
    %c0_i32 = arith.constant 0 : i32
    %c0_i32_0 = arith.constant 0 : i32
    %c0_i32_1 = arith.constant 0 : i32
    return %c0_i32, %c0_i32_0 : i32, i32
  }
  func.func @transform_11(%arg0: i32) -> (i32, i32) {
    %c0_i32 = arith.constant 0 : i32
    %c0_i32_0 = arith.constant 0 : i32
    return %arg0, %c0_i32 : i32, i32
  }
}

</mosaic_0001>

<llo_original>
// kernel: network_anchor_forward.1
$region0: #{network_anchor_forward.1}
  #allocation0 [shape = 'u32[]', space=smem, size = 0x4, offset = 0x4, fixed_abs, tag = 'smem constant byte address 0x4 - core index']
  #allocation1 [shape = 'u32[72,128]{1,0:T(1,128)}', space=vmem, size = 0x9000, scoped, tag = 'internal scratch']
  %s0 = inlined_call_operand.vmem [shape: f32[8,128], index: 0, kind: input, shape index: {}]
  %s1 = inlined_call_operand.vmem [shape: f32[128,128], index: 1, kind: input, shape index: {}]
  %s2 = inlined_call_operand.vmem [shape: f32[1,128], index: 2, kind: input, shape index: {}]
  %s3 = inlined_call_operand.vmem [shape: f32[128,128], index: 3, kind: input, shape index: {}]
  %s4 = inlined_call_operand.vmem [shape: f32[1,128], index: 4, kind: input, shape index: {}]
  %s5 = inlined_call_operand.vmem [shape: f32[128,128], index: 5, kind: input, shape index: {}]
  %s6 = inlined_call_operand.vmem [shape: f32[1,128], index: 6, kind: input, shape index: {}]
  %s7 = inlined_call_operand.vmem [shape: f32[128,128], index: 7, kind: input, shape index: {}]
  %s8 = inlined_call_operand.vmem [shape: f32[1,128], index: 8, kind: input, shape index: {}]
  %s9 = inlined_call_operand.vmem [shape: f32[128,128], index: 9, kind: input, shape index: {}]
  %s10 = inlined_call_operand.vmem [shape: f32[1,128], index: 10, kind: input, shape index: {}]
  %s11 = inlined_call_operand.hbm [shape: f32[8,128], index: 11, kind: output, shape index: {}]
  %s12 = sld [smem:[#allocation0]]
  $region54: #{network_anchor_forward.1} parent=0
    _
  %s14 = ssub.s32 1, %s12
  %s15 = scalar_select 0, %s14, %s12
  $region1: #{network_anchor_forward.1} parent=0
    #allocation2 [shape = 'u8[4096]{0}', space=vmem, size = 0x1000, scoped, tag = 'output window, operand 0, single buffered']
    #allocation3 [shape = 's32[1]{0}', space=sflag, size = 0x4, scoped, tag = 'scoped memory for network_anchor_forward.1']
    %16 = vsyncpa [#allocation3], 0
    // Predicated region
    $region2: #{network_anchor_forward.1} parent=1 // pred_check
      _
    $region3: #{network_anchor_forward.1} parent=1 // pred_check_branch
      %18 = sbr.rel (0) target = $region5
    $region4: #{network_anchor_forward.1} parent=1 // pred_region
      _
    $region5: #{network_anchor_forward.1} parent=1 // pred_fallthru
      _
    // Predicated region
    $region6: #{network_anchor_forward.1} parent=1 // pred_check
      _
    $region7: #{network_anchor_forward.1} parent=1 // pred_check_branch
      %20 = sbr.rel (0) target = $region9
    $region8: #{network_anchor_forward.1} parent=1 // pred_region
      _
    $region9: #{network_anchor_forward.1} parent=1 // pred_fallthru
      _
    // Predicated region
    $region10: #{network_anchor_forward.1} parent=1 // pred_check
      _
    $region11: #{network_anchor_forward.1} parent=1 // pred_check_branch
      %22 = sbr.rel (0) target = $region13
    $region12: #{network_anchor_forward.1} parent=1 // pred_region
      _
    $region13: #{network_anchor_forward.1} parent=1 // pred_fallthru
      _
    // Predicated region
    $region14: #{network_anchor_forward.1} parent=1 // pred_check
      _
    $region15: #{network_anchor_forward.1} parent=1 // pred_check_branch
      %24 = sbr.rel (0) target = $region17
    $region16: #{network_anchor_forward.1} parent=1 // pred_region
      _
    $region17: #{network_anchor_forward.1} parent=1 // pred_fallthru
      _
    // Predicated region
    $region18: #{network_anchor_forward.1} parent=1 // pred_check
      _
    $region19: #{network_anchor_forward.1} parent=1 // pred_check_branch
      %26 = sbr.rel (0) target = $region21
    $region20: #{network_anchor_forward.1} parent=1 // pred_region
      _
    $region21: #{network_anchor_forward.1} parent=1 // pred_fallthru
      _
    // Predicated region
    $region22: #{network_anchor_forward.1} parent=1 // pred_check
      _
    $region23: #{network_anchor_forward.1} parent=1 // pred_check_branch
      %28 = sbr.rel (0) target = $region25
    $region24: #{network_anchor_forward.1} parent=1 // pred_region
      _
    $region25: #{network_anchor_forward.1} parent=1 // pred_fallthru
      _
    // Predicated region
    $region26: #{network_anchor_forward.1} parent=1 // pred_check
      _
    $region27: #{network_anchor_forward.1} parent=1 // pred_check_branch
      %30 = sbr.rel (0) target = $region29
    $region28: #{network_anchor_forward.1} parent=1 // pred_region
      _
    $region29: #{network_anchor_forward.1} parent=1 // pred_fallthru
      _
    // Predicated region
    $region30: #{network_anchor_forward.1} parent=1 // pred_check
      _
    $region31: #{network_anchor_forward.1} parent=1 // pred_check_branch
      %32 = sbr.rel (0) target = $region33
    $region32: #{network_anchor_forward.1} parent=1 // pred_region
      _
    $region33: #{network_anchor_forward.1} parent=1 // pred_fallthru
      _
    // Predicated region
    $region34: #{network_anchor_forward.1} parent=1 // pred_check
      _
    $region35: #{network_anchor_forward.1} parent=1 // pred_check_branch
      %34 = sbr.rel (0) target = $region37
    $region36: #{network_anchor_forward.1} parent=1 // pred_region
      _
    $region37: #{network_anchor_forward.1} parent=1 // pred_fallthru
      _
    // Predicated region
    $region38: #{network_anchor_forward.1} parent=1 // pred_check
      _
    $region39: #{network_anchor_forward.1} parent=1 // pred_check_branch
      %36 = sbr.rel (0) target = $region41
    $region40: #{network_anchor_forward.1} parent=1 // pred_region
      _
    $region41: #{network_anchor_forward.1} parent=1 // pred_fallthru
      _
    // Predicated region
    $region42: #{network_anchor_forward.1} parent=1 // pred_check
      _
    $region43: #{network_anchor_forward.1} parent=1 // pred_check_branch
      %38 = sbr.rel (0) target = $region45
    $region44: #{network_anchor_forward.1} parent=1 // pred_region
      _
    $region45: #{network_anchor_forward.1} parent=1 // pred_fallthru
      _
    %v39 = vld [vmem:[%s0] sm:$0xff]
    %v40 = vld [vmem:[%s1] sm:$0xff]
    %v41 = vld [vmem:[%s1 + $0x8] sm:$0xff]
    %v42 = vld [vmem:[%s1 + $0x10] sm:$0xff]
    %v43 = vld [vmem:[%s1 + $0x18] sm:$0xff]
    %v44 = vld [vmem:[%s1 + $0x20] sm:$0xff]
    %v45 = vld [vmem:[%s1 + $0x28] sm:$0xff]
    %v46 = vld [vmem:[%s1 + $0x30] sm:$0xff]
    %v47 = vld [vmem:[%s1 + $0x38] sm:$0xff]
    %v48 = vld [vmem:[%s1 + $0x40] sm:$0xff]
    %v49 = vld [vmem:[%s1 + $0x48] sm:$0xff]
    %v50 = vld [vmem:[%s1 + $0x50] sm:$0xff]
    %v51 = vld [vmem:[%s1 + $0x58] sm:$0xff]
    %v52 = vld [vmem:[%s1 + $0x60] sm:$0xff]
    %v53 = vld [vmem:[%s1 + $0x68] sm:$0xff]
    %v54 = vld [vmem:[%s1 + $0x70] sm:$0xff]
    %v55 = vld [vmem:[%s1 + $0x78] sm:$0xff]
    %v56 = vld [vmem:[%s2] sm:$0x1]
    %v58 = vperm.slane %v56, 0
    %60 = vmatpush.msra.mxu0 %v55
    %61 = vmatpush.msra.mxu0 %v54
    %62 = vmatpush.msra.mxu0 %v53
    %63 = vmatpush.msra.mxu0 %v52
    %64 = vmatpush.msra.mxu0 %v51
    %65 = vmatpush.msra.mxu0 %v50
    %66 = vmatpush.msra.mxu0 %v49
    %67 = vmatpush.msra.mxu0 %v48
    %68 = vmatpush.msra.mxu0 %v47
    %69 = vmatpush.msra.mxu0 %v46
    %70 = vmatpush.msra.mxu0 %v45
    %71 = vmatpush.msra.mxu0 %v44
    %72 = vmatpush.msra.mxu0 %v43
    %73 = vmatpush.msra.mxu0 %v42
    %74 = vmatpush.msra.mxu0 %v41
    %75 = vmatpush.msra.mxu0 %v40
    %76 = vmatmul.f32.gmra.mxu0 %v39
    %v77 = vpop.f32.mrf.mxu0
    %v78 = vadd.f32 %v58, %v77
    %79 = vdwg.mxu0
    %v80 = vmax.f32 %v78, 0.0
    %v81 = vld [vmem:[%s3] sm:$0xff]
    %v82 = vld [vmem:[%s3 + $0x8] sm:$0xff]
    %v83 = vld [vmem:[%s3 + $0x10] sm:$0xff]
    %v84 = vld [vmem:[%s3 + $0x18] sm:$0xff]
    %v85 = vld [vmem:[%s3 + $0x20] sm:$0xff]
    %v86 = vld [vmem:[%s3 + $0x28] sm:$0xff]
    %v87 = vld [vmem:[%s3 + $0x30] sm:$0xff]
    %v88 = vld [vmem:[%s3 + $0x38] sm:$0xff]
    %v89 = vld [vmem:[%s3 + $0x40] sm:$0xff]
    %v90 = vld [vmem:[%s3 + $0x48] sm:$0xff]
    %v91 = vld [vmem:[%s3 + $0x50] sm:$0xff]
    %v92 = vld [vmem:[%s3 + $0x58] sm:$0xff]
    %v93 = vld [vmem:[%s3 + $0x60] sm:$0xff]
    %v94 = vld [vmem:[%s3 + $0x68] sm:$0xff]
    %v95 = vld [vmem:[%s3 + $0x70] sm:$0xff]
    %v96 = vld [vmem:[%s3 + $0x78] sm:$0xff]
    %v97 = vld [vmem:[%s4] sm:$0x1]
    %v99 = vperm.slane %v97, 0
    %101 = vmatpush.msra.mxu0 %v96
    %102 = vmatpush.msra.mxu0 %v95
    %103 = vmatpush.msra.mxu0 %v94
    %104 = vmatpush.msra.mxu0 %v93
    %105 = vmatpush.msra.mxu0 %v92
    %106 = vmatpush.msra.mxu0 %v91
    %107 = vmatpush.msra.mxu0 %v90
    %108 = vmatpush.msra.mxu0 %v89
    %109 = vmatpush.msra.mxu0 %v88
    %110 = vmatpush.msra.mxu0 %v87
    %111 = vmatpush.msra.mxu0 %v86
    %112 = vmatpush.msra.mxu0 %v85
    %113 = vmatpush.msra.mxu0 %v84
    %114 = vmatpush.msra.mxu0 %v83
    %115 = vmatpush.msra.mxu0 %v82
    %116 = vmatpush.msra.mxu0 %v81
    %117 = vmatmul.f32.gmra.mxu0 %v80
    %v118 = vpop.f32.mrf.mxu0
    %v119 = vadd.f32 %v99, %v118
    %120 = vdwg.mxu0
    %v121 = vmax.f32 %v119, 0.0
    %v122 = vld [vmem:[%s5] sm:$0xff]
    %v123 = vld [vmem:[%s5 + $0x8] sm:$0xff]
    %v124 = vld [vmem:[%s5 + $0x10] sm:$0xff]
    %v125 = vld [vmem:[%s5 + $0x18] sm:$0xff]
    %v126 = vld [vmem:[%s5 + $0x20] sm:$0xff]
    %v127 = vld [vmem:[%s5 + $0x28] sm:$0xff]
    %v128 = vld [vmem:[%s5 + $0x30] sm:$0xff]
    %v129 = vld [vmem:[%s5 + $0x38] sm:$0xff]
    %v130 = vld [vmem:[%s5 + $0x40] sm:$0xff]
    %v131 = vld [vmem:[%s5 + $0x48] sm:$0xff]
    %v132 = vld [vmem:[%s5 + $0x50] sm:$0xff]
    %v133 = vld [vmem:[%s5 + $0x58] sm:$0xff]
    %v134 = vld [vmem:[%s5 + $0x60] sm:$0xff]
    %v135 = vld [vmem:[%s5 + $0x68] sm:$0xff]
    %v136 = vld [vmem:[%s5 + $0x70] sm:$0xff]
    %v137 = vld [vmem:[%s5 + $0x78] sm:$0xff]
    %v138 = vld [vmem:[%s6] sm:$0x1]
    %v140 = vperm.slane %v138, 0
    %142 = vmatpush.msra.mxu0 %v137
    %143 = vmatpush.msra.mxu0 %v136
    %144 = vmatpush.msra.mxu0 %v135
    %145 = vmatpush.msra.mxu0 %v134
    %146 = vmatpush.msra.mxu0 %v133
    %147 = vmatpush.msra.mxu0 %v132
    %148 = vmatpush.msra.mxu0 %v131
    %149 = vmatpush.msra.mxu0 %v130
    %150 = vmatpush.msra.mxu0 %v129
    %151 = vmatpush.msra.mxu0 %v128
    %152 = vmatpush.msra.mxu0 %v127
    %153 = vmatpush.msra.mxu0 %v126
    %154 = vmatpush.msra.mxu0 %v125
    %155 = vmatpush.msra.mxu0 %v124
    %156 = vmatpush.msra.mxu0 %v123
    %157 = vmatpush.msra.mxu0 %v122
    %158 = vmatmul.f32.gmra.mxu0 %v121
    %v159 = vpop.f32.mrf.mxu0
    %v160 = vadd.f32 %v140, %v159
    %161 = vdwg.mxu0
    %v162 = vmax.f32 %v160, 0.0
    %v163 = vld [vmem:[%s7] sm:$0xff]
    %v164 = vld [vmem:[%s7 + $0x8] sm:$0xff]
    %v165 = vld [vmem:[%s7 + $0x10] sm:$0xff]
    %v166 = vld [vmem:[%s7 + $0x18] sm:$0xff]
    %v167 = vld [vmem:[%s7 + $0x20] sm:$0xff]
    %v168 = vld [vmem:[%s7 + $0x28] sm:$0xff]
    %v169 = vld [vmem:[%s7 + $0x30] sm:$0xff]
    %v170 = vld [vmem:[%s7 + $0x38] sm:$0xff]
    %v171 = vld [vmem:[%s7 + $0x40] sm:$0xff]
    %v172 = vld [vmem:[%s7 + $0x48] sm:$0xff]
    %v173 = vld [vmem:[%s7 + $0x50] sm:$0xff]
    %v174 = vld [vmem:[%s7 + $0x58] sm:$0xff]
    %v175 = vld [vmem:[%s7 + $0x60] sm:$0xff]
    %v176 = vld [vmem:[%s7 + $0x68] sm:$0xff]
    %v177 = vld [vmem:[%s7 + $0x70] sm:$0xff]
    %v178 = vld [vmem:[%s7 + $0x78] sm:$0xff]
    %v179 = vld [vmem:[%s8] sm:$0x1]
    %v181 = vperm.slane %v179, 0
    %183 = vmatpush.msra.mxu0 %v178
    %184 = vmatpush.msra.mxu0 %v177
    %185 = vmatpush.msra.mxu0 %v176
    %186 = vmatpush.msra.mxu0 %v175
    %187 = vmatpush.msra.mxu0 %v174
    %188 = vmatpush.msra.mxu0 %v173
    %189 = vmatpush.msra.mxu0 %v172
    %190 = vmatpush.msra.mxu0 %v171
    %191 = vmatpush.msra.mxu0 %v170
    %192 = vmatpush.msra.mxu0 %v169
    %193 = vmatpush.msra.mxu0 %v168
    %194 = vmatpush.msra.mxu0 %v167
    %195 = vmatpush.msra.mxu0 %v166
    %196 = vmatpush.msra.mxu0 %v165
    %197 = vmatpush.msra.mxu0 %v164
    %198 = vmatpush.msra.mxu0 %v163
    %199 = vmatmul.f32.gmra.mxu0 %v162
    %v200 = vpop.f32.mrf.mxu0
    %v201 = vadd.f32 %v181, %v200
    %202 = vdwg.mxu0
    %v203 = vmax.f32 %v201, 0.0
    %v204 = vld [vmem:[%s9] sm:$0xff]
    %v205 = vld [vmem:[%s9 + $0x8] sm:$0xff]
    %v206 = vld [vmem:[%s9 + $0x10] sm:$0xff]
    %v207 = vld [vmem:[%s9 + $0x18] sm:$0xff]
    %v208 = vld [vmem:[%s9 + $0x20] sm:$0xff]
    %v209 = vld [vmem:[%s9 + $0x28] sm:$0xff]
    %v210 = vld [vmem:[%s9 + $0x30] sm:$0xff]
    %v211 = vld [vmem:[%s9 + $0x38] sm:$0xff]
    %v212 = vld [vmem:[%s9 + $0x40] sm:$0xff]
    %v213 = vld [vmem:[%s9 + $0x48] sm:$0xff]
    %v214 = vld [vmem:[%s9 + $0x50] sm:$0xff]
    %v215 = vld [vmem:[%s9 + $0x58] sm:$0xff]
    %v216 = vld [vmem:[%s9 + $0x60] sm:$0xff]
    %v217 = vld [vmem:[%s9 + $0x68] sm:$0xff]
    %v218 = vld [vmem:[%s9 + $0x70] sm:$0xff]
    %v219 = vld [vmem:[%s9 + $0x78] sm:$0xff]
    %v220 = vld [vmem:[%s10] sm:$0x1]
    %v222 = vperm.slane %v220, 0
    %224 = vmatpush.msra.mxu0 %v219
    %225 = vmatpush.msra.mxu0 %v218
    %226 = vmatpush.msra.mxu0 %v217
    %227 = vmatpush.msra.mxu0 %v216
    %228 = vmatpush.msra.mxu0 %v215
    %229 = vmatpush.msra.mxu0 %v214
    %230 = vmatpush.msra.mxu0 %v213
    %231 = vmatpush.msra.mxu0 %v212
    %232 = vmatpush.msra.mxu0 %v211
    %233 = vmatpush.msra.mxu0 %v210
    %234 = vmatpush.msra.mxu0 %v209
    %235 = vmatpush.msra.mxu0 %v208
    %236 = vmatpush.msra.mxu0 %v207
    %237 = vmatpush.msra.mxu0 %v206
    %238 = vmatpush.msra.mxu0 %v205
    %239 = vmatpush.msra.mxu0 %v204
    %240 = vmatmul.f32.gmra.mxu0 %v203
    %v241 = vpop.f32.mrf.mxu0
    %v242 = vadd.f32 %v222, %v241
    %243 = vdwg.mxu0
    %244 = vst [vmem:[#allocation2] sm:$0xff] %v242
    // Predicated region
    $region46: #{network_anchor_forward.1} parent=1 // pred_check
      _
    $region47: #{network_anchor_forward.1} parent=1 // pred_check_branch
      %246 = sbr.rel (0) target = $region49
    $region48: #{network_anchor_forward.1} parent=1 // pred_region
      %248 = vsyncadd [#allocation3], 0
      %s250 = sshll.u32 [#allocation2], 4
      %s251 = int_to_ptr.vmem [resolvable:$true] %s250
      %s252 = sshll.u32 %s11, 4
      %s253 = int_to_ptr.hbm [resolvable:$true] %s252
      %255 = dma.vmem_to_hbm [thread:$0]  %s251, 128, %s253, [#allocation3]
    $region49: #{network_anchor_forward.1} parent=1 // pred_fallthru
      _
    // Predicated region
    $region50: #{network_anchor_forward.1} parent=1 // pred_check
      _
    $region51: #{network_anchor_forward.1} parent=1 // pred_check_branch
      %257 = sbr.rel (0) target = $region53
    $region52: #{network_anchor_forward.1} parent=1 // pred_region
      %259 = dma.done [#allocation3], 128
    $region53: #{network_anchor_forward.1} parent=1 // pred_fallthru
      _
    %260 = vsyncpa [#allocation3], 1

</llo_original>
